<compile_context>
chip_gen: v5e
topology: v5e:2x2
jax: 0.10.0
libtpu: 0.0.40
codegen_flags: <defaults>
</compile_context>

<pallas_src>
import functools
import math

import jax
import jax.numpy as jnp
from jax.experimental import pallas as pl
from jax.experimental.pallas import tpu as pltpu

LN_EPS = 1e-5  # PyTorch nn.LayerNorm default
_SQRT_HALF = 0.7071067811865476


# ----------------------------------------------------------------------------- helpers
def _cdiv(a, b):
    return (a + b - 1) // b


def _round_up(a, b):
    return _cdiv(a, b) * b


def _row_tile(m, tm_req, *, min_steps=4, min_tile=128):
    """Row tile: as large as requested (clamped to the row count rounded up to 8),
    then shrunk (halving) until the grid has >= min_steps steps so both v7x
    TensorCores get >= 2 pipelined steps each.  Harmless on 1-TC v5e/v6e."""
    tm = min(_round_up(tm_req, 8), _round_up(m, 8))
    while _cdiv(m, tm) < min_steps and tm > min_tile:
        tm = max(min_tile, _round_up(_cdiv(tm, 2), 8))
    return tm


def _default_vmem_limit():
    """~75% of physical VMEM (leave compiler-scratch headroom):
    ~96 MiB on 128-MiB parts (v5e/v6e), ~48 MiB on v7x (64 MiB per TC)."""
    try:
        cap = pltpu.get_tpu_info().vmem_capacity_bytes
    except Exception:
        cap = 64 * (2 ** 20)
    return int(min(cap * 3 // 4, 112 * (2 ** 20)))


def _const_spec(shape):
    """BlockSpec for a grid-invariant operand: full block, single-buffered."""
    return pl.BlockSpec(shape, lambda i: (0,) * len(shape),
                        pipeline_mode=pl.Buffered(1))


def _erf_poly(z):
    # Abramowitz & Stegun 7.1.26, |error| < 1.5e-7.  Built only from mul/add/exp/
    # where/abs so it is guaranteed to lower on Mosaic.
    a1, a2, a3, a4, a5 = (0.254829592, -0.284496736, 1.421413741,
                          -1.453152027, 1.061405429)
    p = 0.3275911
    sign = jnp.where(z >= 0.0, 1.0, -1.0)
    za = jnp.abs(z)
    t = 1.0 / (1.0 + p * za)
    poly = ((((a5 * t + a4) * t + a3) * t + a2) * t + a1) * t
    return sign * (1.0 - poly * jnp.exp(-(za * za)))


def _gelu_exact(x):
    # Matches PyTorch F.gelu (erf form) to ~1e-7.
    return 0.5 * x * (1.0 + _erf_poly(x * _SQRT_HALF))


def _layernorm_onepass(x, gamma, beta):
    # Single reduction pair (sum, sum-of-squares) -> halves XLU reduction traffic.
    d = x.shape[-1]
    inv_d = 1.0 / d
    s1 = jnp.sum(x, axis=-1, keepdims=True)
    s2 = jnp.sum(x * x, axis=-1, keepdims=True)
    mean = s1 * inv_d
    var = jnp.maximum(s2 * inv_d - mean * mean, 0.0)
    xn = (x - mean) * jax.lax.rsqrt(var + LN_EPS)
    return xn * gamma + beta


# ----------------------------------------------------------------------------- kernels
def _ln_qkv_kernel(x_ref, g_ref, b_ref, wqkv_ref, bqkv_ref, o_ref):
    """LN1 followed by the fused QKV projection for one tile of rows."""
    x = x_ref[...].astype(jnp.float32)
    xn = _layernorm_onepass(x, g_ref[...], b_ref[...])
    # bf16 operands into the MXU, f32 accumulation.
    qkv = jnp.dot(xn.astype(wqkv_ref.dtype), wqkv_ref[...],
                  preferred_element_type=jnp.float32)
    o_ref[...] = (qkv + bqkv_ref[...]).astype(o_ref.dtype)      # bf16 store


def _attn_kernel(*refs, sm_scale, num_heads, d_k, d_model, use_bias):
    """Masked softmax attention for one batch; all heads handled in-kernel.

    qkv_ref : (S, 3*D) bf16 block (columns = [Q | K | V], heads interleaved per D).
    o_ref   : (S, D)   bf16 block, already in row-major concat-heads layout.
    """
    if use_bias:
        bias_ref, qkv_ref, o_ref = refs
        bias = bias_ref[...].astype(jnp.float32)                # (1, S) key bias
    else:
        qkv_ref, o_ref = refs
        bias = None

    qkv = qkv_ref[...]                                          # one lane-dense load
    heads_out = []
    for h in range(num_heads):
        c = h * d_k
        q = qkv[:, c:c + d_k]                                   # (S, d_k) bf16
        k = qkv[:, d_model + c:d_model + c + d_k]
        v = qkv[:, 2 * d_model + c:2 * d_model + c + d_k]
        s = jax.lax.dot_general(q, k, (((1,), (1,)), ((), ())),
                                preferred_element_type=jnp.float32) * sm_scale
        if bias is not None:
            s = s + bias                                        # broadcast over queries
        s = s - jnp.max(s, axis=-1, keepdims=True)
        p = jnp.exp(s)
        p = p / jnp.sum(p, axis=-1, keepdims=True)              # exact normalization
        heads_out.append(jnp.dot(p.astype(v.dtype), v,
                                 preferred_element_type=jnp.float32))
    # Single lane-dense store of the full (S, D) block.
    o_ref[...] = jnp.concatenate(heads_out, axis=-1).astype(o_ref.dtype)


def _attn_out_ff_kernel(z_ref, x_ref, wo_ref, bo_ref, g2_ref, be2_ref,
                        w1_ref, b1_ref, w2_ref, b2_ref, o_ref,
                        *, activation, ff_chunk):
    """Wo-projection + residual + LN2 + FFN + residual for one tile of rows."""
    x = x_ref[...].astype(jnp.float32)
    ax = jnp.dot(z_ref[...], wo_ref[...],
                 preferred_element_type=jnp.float32) + bo_ref[...]
    u = x + ax                                                  # x + attn(x)

    un = _layernorm_onepass(u, g2_ref[...], be2_ref[...]).astype(w1_ref.dtype)

    d_ff = w1_ref.shape[1]
    ff = jnp.zeros_like(u)
    # Chunk the FFN inner dimension so the live (tm, ff_chunk) f32 intermediate
    # stays bounded (vreg pressure / VMEM) even at large d_ff.
    for c in range(0, d_ff, ff_chunk):
        h = jnp.dot(un, w1_ref[:, c:c + ff_chunk],
                    preferred_element_type=jnp.float32) + b1_ref[:, c:c + ff_chunk]
        h = _gelu_exact(h) if activation == "gelu" else jnp.maximum(h, 0.0)
        ff = ff + jnp.dot(h.astype(w2_ref.dtype), w2_ref[c:c + ff_chunk, :],
                          preferred_element_type=jnp.float32)

    o_ref[...] = (u + ff + b2_ref[...]).astype(o_ref.dtype)     # x + ax + bx


# ----------------------------------------------------------------------------- wrapper
def encoder_layer_pallas(x, params, mask=None, *, num_heads, tm=512, ff_chunk=2048,
                         activation="gelu", vmem_limit_bytes=None):
    """x: (batch, seq, d_model) -> (batch, seq, d_model).  Eval-mode EncoderLayer."""
    f32, bf16 = jnp.float32, jnp.bfloat16
    B, S, D = x.shape
    H = num_heads
    assert D % H == 0
    dk = D // H
    F = params["w1"].shape[1]
    M = B * S

    tm = _row_tile(M, tm)
    fc = ff_chunk if (F > ff_chunk and F % ff_chunk == 0) else F
    if vmem_limit_bytes is None:
        vmem_limit_bytes = _default_vmem_limit()

    cp_rows = pltpu.CompilerParams(dimension_semantics=("parallel",),
                                   vmem_limit_bytes=vmem_limit_bytes)
    cp_batch = pltpu.CompilerParams(dimension_semantics=("parallel",),
                                    vmem_limit_bytes=vmem_limit_bytes)

    # Row-major token view in the native dtype: free reshape, no up-cast, no pad copy.
    x2d = x.reshape(M, D)
    n_row_blocks = _cdiv(M, tm)
    itemsize = x.dtype.itemsize

    # ---------------- K1: LN1 + fused QKV projection (bf16 output) ----------------
    wqkv = jnp.concatenate([params["wq"], params["wk"], params["wv"]],
                           axis=1).astype(bf16)                      # (D, 3D)
    bqkv = jnp.concatenate([params["bq"], params["bk"], params["bv"]]
                           ).reshape(1, 3 * D).astype(f32)
    g1 = params["ln1_g"].reshape(1, D).astype(f32)
    be1 = params["ln1_b"].reshape(1, D).astype(f32)

    qkv = pl.pallas_call(
        _ln_qkv_kernel,
        out_shape=jax.ShapeDtypeStruct((M, 3 * D), bf16),
        grid_spec=pltpu.PrefetchScalarGridSpec(
            num_scalar_prefetch=0,
            grid=(n_row_blocks,),
            in_specs=[
                pl.BlockSpec((tm, D), lambda i: (i, 0)),     # x rows (pipelined)
                _const_spec((1, D)),                         # ln1 gamma
                _const_spec((1, D)),                         # ln1 beta
                _const_spec((D, 3 * D)),                     # Wqkv (bf16, 1 buffer)
                _const_spec((1, 3 * D)),                     # bqkv
            ],
            out_specs=pl.BlockSpec((tm, 3 * D), lambda i: (i, 0)),
        ),
        compiler_params=cp_rows,
        cost_estimate=pl.CostEstimate(
            flops=2 * M * D * 3 * D + 10 * M * D,
            transcendentals=M,
            bytes_accessed=M * D * itemsize + M * 3 * D * 2 + D * 3 * D * 2 + 16 * D),
    )(x2d, g1, be1, wqkv, bqkv)

    # (M, 3D) -> (B, S, 3D): leading-dim split of a contiguous buffer (free).
    qkv3 = qkv.reshape(B, S, 3 * D)

    # ---------------- K2: per-batch masked softmax attention ----------------
    attn_kernel = functools.partial(
        _attn_kernel, sm_scale=1.0 / math.sqrt(dk), num_heads=H, d_k=dk,
        d_model=D, use_bias=mask is not None)

    in_specs = [pl.BlockSpec((None, S, 3 * D), lambda b: (b, 0, 0))]
    args = [qkv3]
    if mask is not None:
        # Additive key-mask bias precomputed once: (1 - mask) * -10000.
        bias = ((1.0 - mask.astype(f32)) * (-10000.0)).reshape(B, 1, S)
        in_specs = [pl.BlockSpec((None, 1, S), lambda b: (b, 0, 0))] + in_specs
        args = [bias] + args

    z = pl.pallas_call(
        attn_kernel,
        out_shape=jax.ShapeDtypeStruct((B, S, D), bf16),
        grid_spec=pltpu.PrefetchScalarGridSpec(
            num_scalar_prefetch=0,
            grid=(B,),
            in_specs=in_specs,
            out_specs=pl.BlockSpec((None, S, D), lambda b: (b, 0, 0)),
        ),
        compiler_params=cp_batch,
        cost_estimate=pl.CostEstimate(
            flops=4 * B * S * S * D,
            transcendentals=B * H * S * S,
            bytes_accessed=B * S * 3 * D * 2 + B * S * D * 2 + B * S * 4),
    )(*args)

    # (B, S, D) -> (M, D): free reshape, already in concat-heads row-major layout.
    z2d = z.reshape(M, D)

    # ---------------- K3: Wo proj + residual + LN2 + FFN + residual ----------------
    wo = params["wo"].astype(bf16)
    bo = params["bo"].reshape(1, D).astype(f32)
    g2 = params["ln2_g"].reshape(1, D).astype(f32)
    be2 = params["ln2_b"].reshape(1, D).astype(f32)
    w1 = params["w1"].astype(bf16)
    b1 = params["b1"].reshape(1, F).astype(f32)
    w2 = params["w2"].astype(bf16)
    b2 = params["b2"].reshape(1, D).astype(f32)

    out2d = pl.pallas_call(
        functools.partial(_attn_out_ff_kernel, activation=activation, ff_chunk=fc),
        out_shape=jax.ShapeDtypeStruct((M, D), x.dtype),
        grid_spec=pltpu.PrefetchScalarGridSpec(
            num_scalar_prefetch=0,
            grid=(n_row_blocks,),
            in_specs=[
                pl.BlockSpec((tm, D), lambda i: (i, 0)),     # attention rows (bf16)
                pl.BlockSpec((tm, D), lambda i: (i, 0)),     # x rows (residual)
                _const_spec((D, D)), _const_spec((1, D)),    # Wo, bo
                _const_spec((1, D)), _const_spec((1, D)),    # ln2 gamma, beta
                _const_spec((D, F)), _const_spec((1, F)),    # W1, b1
                _const_spec((F, D)), _const_spec((1, D)),    # W2, b2
            ],
            out_specs=pl.BlockSpec((tm, D), lambda i: (i, 0)),
        ),
        compiler_params=cp_rows,
        cost_estimate=pl.CostEstimate(
            flops=2 * M * D * D + 4 * M * D * F + 16 * M * D,
            transcendentals=M * F + M,
            bytes_accessed=M * D * 2 + 2 * M * D * itemsize
                           + (D * D + 2 * D * F) * 2 + (5 * D + F) * 4),
    )(z2d, x2d, wo, bo, g2, be2, w1, b1, w2, b2)

    return out2d.reshape(B, S, D)


# ----------------------------------------------------------------------------- reference
def encoder_layer_ref(x, params, mask=None, *, num_heads, activation="gelu"):
    """Pure-JAX reference matching PyTorch EncoderLayer.forward (eval mode).
    Mirrors the kernel's dtype policy (bf16 matmul operands and bf16 inter-stage
    hand-offs, f32 accumulation / softmax / LayerNorm statistics)."""
    f32, bf16 = jnp.float32, jnp.bfloat16
    B, S, D = x.shape
    H = num_heads
    dk = D // H

    def ln(v, g, b):
        m = jnp.mean(v, axis=-1, keepdims=True)
        var = jnp.mean((v - m) ** 2, axis=-1, keepdims=True)
        return (v - m) / jnp.sqrt(var + LN_EPS) * g + b

    def mm(a, w, b):
        return jnp.dot(a.astype(bf16), w.astype(bf16),
                       preferred_element_type=f32) + b

    xf = x.astype(f32)
    xn = ln(xf, params["ln1_g"], params["ln1_b"])
    q = mm(xn, params["wq"], params["bq"]).astype(bf16)
    k = mm(xn, params["wk"], params["bk"]).astype(bf16)
    v = mm(xn, params["wv"], params["bv"]).astype(bf16)

    def heads(t):
        return t.reshape(B, S, H, dk).transpose(0, 2, 1, 3)

    qh, kh, vh = heads(q), heads(k), heads(v)
    s = jnp.einsum("bhqd,bhkd->bhqk", qh, kh,
                   preferred_element_type=f32) / math.sqrt(dk)
    if mask is not None:
        s = s + (1.0 - mask.astype(f32))[:, None, None, :] * (-10000.0)
    p = jax.nn.softmax(s, axis=-1)
    z = jnp.einsum("bhqk,bhkd->bhqd", p.astype(bf16), vh,
                   preferred_element_type=f32)
    z = z.transpose(0, 2, 1, 3).reshape(B, S, D).astype(bf16)
    ax = mm(z, params["wo"], params["bo"])

    u = xf + ax
    un = ln(u, params["ln2_g"], params["ln2_b"])
    h = mm(un, params["w1"], params["b1"])
    h = jax.nn.gelu(h, approximate=False) if activation == "gelu" else jnp.maximum(h, 0.0)
    bx = mm(h, params["w2"], params["b2"])
    return (u + bx).astype(x.dtype)


# ----------------------------------------------------------------------------- test
if __name__ == "__main__":
    B, S, D, H, F = 2, 8, 128, 4, 256   # batch, seq, d_model, num_heads, d_ff

    ks = jax.random.split(jax.random.PRNGKey(0), 18)
    std = 0.125 / math.sqrt(D)          # EncoderLayer._init_parameters weight std

    def w_init(key, shape):
        return std * jax.random.normal(key, shape, jnp.float32)

    def b_init(key, shape):             # non-zero to exercise the bias paths
        return 0.02 * jax.random.normal(key, shape, jnp.float32)

    # Weights stored (in, out) = transposed vs. nn.Linear's (out, in).
    params = {
        "ln1_g": 1.0 + 0.1 * jax.random.normal(ks[0], (D,), jnp.float32),
        "ln1_b": 0.05 * jax.random.normal(ks[1], (D,), jnp.float32),
        "wq": w_init(ks[2], (D, D)), "bq": b_init(ks[3], (D,)),
        "wk": w_init(ks[4], (D, D)), "bk": b_init(ks[5], (D,)),
        "wv": w_init(ks[6], (D, D)), "bv": b_init(ks[7], (D,)),
        "wo": w_init(ks[8], (D, D)), "bo": b_init(ks[9], (D,)),
        "ln2_g": 1.0 + 0.1 * jax.random.normal(ks[10], (D,), jnp.float32),
        "ln2_b": 0.05 * jax.random.normal(ks[11], (D,), jnp.float32),
        "w1": w_init(ks[12], (D, F)), "b1": b_init(ks[13], (F,)),
        "w2": w_init(ks[14], (F, D)), "b2": b_init(ks[15], (D,)),
    }
    x = jax.random.normal(ks[16], (B, S, D), jnp.float32)
    # key-padding mask: batch 1 has its last 3 positions masked out
    mask = jnp.ones((B, S), jnp.float32).at[1, S - 3:].set(0.0)

    out = jax.block_until_ready(
        encoder_layer_pallas(x, params, mask=mask, num_heads=H))
    ref = encoder_layer_ref(x, params, mask=mask, num_heads=H)
    assert out.shape == (B, S, D)
    assert jnp.allclose(out, ref, atol=5e-3, rtol=5e-3), "mismatch vs reference (mask)"

    out_nm = jax.block_until_ready(
        encoder_layer_pallas(x, params, mask=None, num_heads=H))
    ref_nm = encoder_layer_ref(x, params, mask=None, num_heads=H)
    assert jnp.allclose(out_nm, ref_nm, atol=5e-3, rtol=5e-3), "mismatch vs reference (no mask)"

    print("KERNEL_OK")
</pallas_src>

<mosaic_0001>
module attributes {stable_mosaic.version = 11 : i64} {
  func.func @_ln_qkv_kernel(%arg0: i32, %arg1: memref<16x128xf32, #tpu.memory_space<vmem>>, %arg2: memref<1x128xf32, #tpu.memory_space<vmem>>, %arg3: memref<1x128xf32, #tpu.memory_space<vmem>>, %arg4: memref<128x384xbf16, #tpu.memory_space<vmem>>, %arg5: memref<1x384xf32, #tpu.memory_space<vmem>>, %arg6: memref<16x384xbf16, #tpu.memory_space<vmem>>) attributes {dimension_semantics = [#tpu.dimension_semantics<parallel>], iteration_bounds = array<i64: 1>, scalar_prefetch = 0 : i64, scratch_operands = 0 : i64, tpu.core_type = #tpu.core_type<tc>, window_params = [{transform_indices = @transform_0, window_bounds = array<i64: 16, 128>}, {pipeline_mode = #tpu.pipeline_mode<synchronous>, transform_indices = @transform_1, window_bounds = array<i64: 1, 128>}, {pipeline_mode = #tpu.pipeline_mode<synchronous>, transform_indices = @transform_2, window_bounds = array<i64: 1, 128>}, {pipeline_mode = #tpu.pipeline_mode<synchronous>, transform_indices = @transform_3, window_bounds = array<i64: 128, 384>}, {pipeline_mode = #tpu.pipeline_mode<synchronous>, transform_indices = @transform_4, window_bounds = array<i64: 1, 384>}, {transform_indices = @transform_5, window_bounds = array<i64: 16, 384>}]} {
    %c0 = arith.constant 0 : index
    %c0_0 = arith.constant 0 : index
    %0 = vector.load %arg1[%c0, %c0_0] : memref<16x128xf32, #tpu.memory_space<vmem>>, vector<16x128xf32>
    %c0_1 = arith.constant 0 : index
    %c0_2 = arith.constant 0 : index
    %1 = vector.load %arg2[%c0_1, %c0_2] : memref<1x128xf32, #tpu.memory_space<vmem>>, vector<1x128xf32>
    %c0_3 = arith.constant 0 : index
    %c0_4 = arith.constant 0 : index
    %2 = vector.load %arg3[%c0_3, %c0_4] : memref<1x128xf32, #tpu.memory_space<vmem>>, vector<1x128xf32>
    %cst = arith.constant dense<0.000000e+00> : vector<16xf32>
    %3 = vector.multi_reduction <add>, %0, %cst [1] : vector<16x128xf32> to vector<16xf32>
    %4 = vector.shape_cast %3 : vector<16xf32> to vector<16x1xf32>
    %5 = arith.mulf %0, %0 : vector<16x128xf32>
    %cst_5 = arith.constant dense<0.000000e+00> : vector<16xf32>
    %6 = vector.multi_reduction <add>, %5, %cst_5 [1] : vector<16x128xf32> to vector<16xf32>
    %7 = vector.shape_cast %6 : vector<16xf32> to vector<16x1xf32>
    %cst_6 = arith.constant 7.812500e-03 : f32
    %8 = vector.broadcast %cst_6 : f32 to vector<16x1xf32>
    %9 = arith.mulf %4, %8 : vector<16x1xf32>
    %cst_7 = arith.constant 7.812500e-03 : f32
    %10 = vector.broadcast %cst_7 : f32 to vector<16x1xf32>
    %11 = arith.mulf %7, %10 : vector<16x1xf32>
    %12 = arith.mulf %9, %9 : vector<16x1xf32>
    %13 = arith.subf %11, %12 : vector<16x1xf32>
    %cst_8 = arith.constant 0.000000e+00 : f32
    %14 = vector.broadcast %cst_8 : f32 to vector<16x1xf32>
    %15 = arith.maximumf %13, %14 : vector<16x1xf32>
    %16 = vector.broadcast %9 : vector<16x1xf32> to vector<16x128xf32>
    %17 = arith.subf %0, %16 : vector<16x128xf32>
    %cst_9 = arith.constant 9.99999974E-6 : f32
    %18 = vector.broadcast %cst_9 : f32 to vector<16x1xf32>
    %19 = arith.addf %15, %18 : vector<16x1xf32>
    %20 = math.rsqrt %19 : vector<16x1xf32>
    %21 = vector.broadcast %20 : vector<16x1xf32> to vector<16x128xf32>
    %22 = arith.mulf %17, %21 : vector<16x128xf32>
    %23 = vector.broadcast %1 : vector<1x128xf32> to vector<16x128xf32>
    %24 = arith.mulf %22, %23 : vector<16x128xf32>
    %25 = vector.broadcast %2 : vector<1x128xf32> to vector<16x128xf32>
    %26 = arith.addf %24, %25 : vector<16x128xf32>
    %27 = arith.truncf %26 : vector<16x128xf32> to vector<16x128xbf16>
    %c0_10 = arith.constant 0 : index
    %c0_11 = arith.constant 0 : index
    %28 = vector.load %arg4[%c0_10, %c0_11] : memref<128x384xbf16, #tpu.memory_space<vmem>>, vector<128x384xbf16>
    %cst_12 = arith.constant dense<0.000000e+00> : vector<16x384xf32>
    %29 = tpu.matmul %27, %28, %cst_12 {dimension_numbers = #tpu.dot_dimension_numbers<[1], [0], [0], [1], [0, 0, 1, 1], [], []>} : vector<16x128xbf16>, vector<128x384xbf16>, vector<16x384xf32> -> vector<16x384xf32>
    %c0_13 = arith.constant 0 : index
    %c0_14 = arith.constant 0 : index
    %30 = vector.load %arg5[%c0_13, %c0_14] : memref<1x384xf32, #tpu.memory_space<vmem>>, vector<1x384xf32>
    %31 = vector.broadcast %30 : vector<1x384xf32> to vector<16x384xf32>
    %32 = arith.addf %29, %31 : vector<16x384xf32>
    %33 = arith.truncf %32 : vector<16x384xf32> to vector<16x384xbf16>
    %c0_15 = arith.constant 0 : index
    %c0_16 = arith.constant 0 : index
    %34 = vector.load %arg6[%c0_15, %c0_16] : memref<16x384xbf16, #tpu.memory_space<vmem>>, vector<16x384xbf16>
    tpu.vector_store %arg6[%c0_15, %c0_16], %33 {strides = array<i32>} : memref<16x384xbf16, #tpu.memory_space<vmem>>, vector<16x384xbf16>,
    return
  }
  func.func @transform_0(%arg0: i32) -> (i32, i32) {
    %c0_i32 = arith.constant 0 : i32
    %c0_i32_0 = arith.constant 0 : i32
    return %arg0, %c0_i32 : i32, i32
  }
  func.func @transform_1(%arg0: i32) -> (i32, i32) {
    %c0_i32 = arith.constant 0 : i32
    %c0_i32_0 = arith.constant 0 : i32
    %c0_i32_1 = arith.constant 0 : i32
    return %c0_i32, %c0_i32_0 : i32, i32
  }
  func.func @transform_2(%arg0: i32) -> (i32, i32) {
    %c0_i32 = arith.constant 0 : i32
    %c0_i32_0 = arith.constant 0 : i32
    %c0_i32_1 = arith.constant 0 : i32
    return %c0_i32, %c0_i32_0 : i32, i32
  }
  func.func @transform_3(%arg0: i32) -> (i32, i32) {
    %c0_i32 = arith.constant 0 : i32
    %c0_i32_0 = arith.constant 0 : i32
    %c0_i32_1 = arith.constant 0 : i32
    return %c0_i32, %c0_i32_0 : i32, i32
  }
  func.func @transform_4(%arg0: i32) -> (i32, i32) {
    %c0_i32 = arith.constant 0 : i32
    %c0_i32_0 = arith.constant 0 : i32
    %c0_i32_1 = arith.constant 0 : i32
    return %c0_i32, %c0_i32_0 : i32, i32
  }
  func.func @transform_5(%arg0: i32) -> (i32, i32) {
    %c0_i32 = arith.constant 0 : i32
    %c0_i32_0 = arith.constant 0 : i32
    return %arg0, %c0_i32 : i32, i32
  }
}

</mosaic_0001>

<llo_original>
// kernel: tpu_custom_call.1
$region0: #{tpu_custom_call.1}
  #allocation0 [shape = 'u32[]', space=smem, size = 0x4, offset = 0x4, fixed_abs, tag = 'smem constant byte address 0x4 - core index']
  #allocation1 [shape = 'u32[72,128]{1,0:T(1,128)}', space=vmem, size = 0x9000, scoped, tag = 'internal scratch']
  %s0 = inlined_call_operand.hbm [shape: f32[16,128], index: 0, kind: input, shape index: {}]
  %s1 = inlined_call_operand.hbm [shape: f32[1,128], index: 1, kind: input, shape index: {}]
  %s2 = inlined_call_operand.hbm [shape: f32[1,128], index: 2, kind: input, shape index: {}]
  %s3 = inlined_call_operand.hbm [shape: bf16[128,384], index: 3, kind: input, shape index: {}]
  %s4 = inlined_call_operand.vmem [shape: f32[1,384], index: 4, kind: input, shape index: {}]
  %s5 = inlined_call_operand.hbm [shape: bf16[16,384], index: 5, kind: output, shape index: {}]
  %s6 = sld [smem:[#allocation0]]
  $region46: #{tpu_custom_call.1} parent=0
    _
  %s8 = ssub.s32 1, %s6
  %s9 = scalar_select 0, %s8, %s6
  $region1: #{tpu_custom_call.1} parent=0
    #allocation2 [shape = 'u8[8192]{0}', space=vmem, size = 0x2000, scoped, tag = 'input window, operand 0, single buffered']
    #allocation3 [shape = 's32[1]{0}', space=sflag, size = 0x4, scoped, tag = 'scoped memory for tpu_custom_call.1']
    #allocation4 [shape = 's32[1]{0}', space=sflag, size = 0x4, scoped, tag = 'scoped memory for tpu_custom_call.1']
    #allocation5 [shape = 'u8[512]{0}', space=vmem, size = 0x400, scoped, tag = 'input window, operand 1, single buffered']
    #allocation6 [shape = 's32[1]{0}', space=sflag, size = 0x4, scoped, tag = 'scoped memory for tpu_custom_call.1']
    #allocation7 [shape = 'u8[512]{0}', space=vmem, size = 0x400, scoped, tag = 'input window, operand 2, single buffered']
    #allocation8 [shape = 'u8[98304]{0}', space=vmem, size = 0x18000, scoped, tag = 'input window, operand 3, single buffered']
    #allocation9 [shape = 's32[1]{0}', space=sflag, size = 0x4, scoped, tag = 'scoped memory for tpu_custom_call.1']
    #allocation10 [shape = 'u8[12288]{0}', space=vmem, size = 0x3000, scoped, tag = 'output window, operand 0, single buffered']
    %10 = vsyncpa [#allocation3], 0
    %11 = vsyncpa [#allocation6], 0
    %12 = vsyncpa [#allocation9], 0
    %13 = vsyncpa [#allocation4], 0
    // Predicated region
    $region2: #{tpu_custom_call.1} parent=1 // pred_check
      _
    $region3: #{tpu_custom_call.1} parent=1 // pred_check_branch
      %15 = sbr.rel (0) target = $region5
    $region4: #{tpu_custom_call.1} parent=1 // pred_region
      %17 = vsyncadd [#allocation3], 0
      %s18 = sshll.u32 %s0, 4
      %s19 = int_to_ptr.hbm [resolvable:$true] %s18
      %s20 = sshll.u32 [#allocation2], 4
      %s21 = int_to_ptr.vmem [resolvable:$true] %s20
      %26 = dma.hbm_to_vmem [thread:$0]  %s19, 256, %s21, [#allocation3], 128, 128, 8
    $region5: #{tpu_custom_call.1} parent=1 // pred_fallthru
      _
    // Predicated region
    $region6: #{tpu_custom_call.1} parent=1 // pred_check
      _
    $region7: #{tpu_custom_call.1} parent=1 // pred_check_branch
      %28 = sbr.rel (0) target = $region9
    $region8: #{tpu_custom_call.1} parent=1 // pred_region
      %30 = vsyncadd [#allocation6], 0
      %s32 = sshll.u32 %s1, 4
      %s33 = int_to_ptr.hbm [resolvable:$true] %s32
      %s34 = sshll.u32 [#allocation5], 4
      %s35 = int_to_ptr.vmem [resolvable:$true] %s34
      %37 = dma.hbm_to_vmem [thread:$0]  %s33, 16, %s35, [#allocation6]
    $region9: #{tpu_custom_call.1} parent=1 // pred_fallthru
      _
    // Predicated region
    $region10: #{tpu_custom_call.1} parent=1 // pred_check
      _
    $region11: #{tpu_custom_call.1} parent=1 // pred_check_branch
      %39 = sbr.rel (0) target = $region13
    $region12: #{tpu_custom_call.1} parent=1 // pred_region
      %41 = vsyncadd [#allocation6], 0
      %s43 = sshll.u32 %s2, 4
      %s44 = int_to_ptr.hbm [resolvable:$true] %s43
      %s45 = sshll.u32 [#allocation7], 4
      %s46 = int_to_ptr.vmem [resolvable:$true] %s45
      %48 = dma.hbm_to_vmem [thread:$0]  %s44, 16, %s46, [#allocation6]
    $region13: #{tpu_custom_call.1} parent=1 // pred_fallthru
      _
    // Predicated region
    $region14: #{tpu_custom_call.1} parent=1 // pred_check
      _
    $region15: #{tpu_custom_call.1} parent=1 // pred_check_branch
      %50 = sbr.rel (0) target = $region17
    $region16: #{tpu_custom_call.1} parent=1 // pred_region
      %52 = vsyncadd [#allocation9], 0
      %s53 = sshll.u32 %s3, 4
      %s54 = int_to_ptr.hbm [resolvable:$true] %s53
      %s55 = sshll.u32 [#allocation8], 4
      %s56 = int_to_ptr.vmem [resolvable:$true] %s55
      %61 = dma.hbm_to_vmem [thread:$0]  %s54, 3072, %s56, [#allocation9], 192, 192, 12
    $region17: #{tpu_custom_call.1} parent=1 // pred_fallthru
      _
    // Predicated region
    $region18: #{tpu_custom_call.1} parent=1 // pred_check
      _
    $region19: #{tpu_custom_call.1} parent=1 // pred_check_branch
      %63 = sbr.rel (0) target = $region21
    $region20: #{tpu_custom_call.1} parent=1 // pred_region
      _
    $region21: #{tpu_custom_call.1} parent=1 // pred_fallthru
      _
    // Predicated region
    $region22: #{tpu_custom_call.1} parent=1 // pred_check
      _
    $region23: #{tpu_custom_call.1} parent=1 // pred_check_branch
      %65 = sbr.rel (0) target = $region25
    $region24: #{tpu_custom_call.1} parent=1 // pred_region
      %67 = dma.done [#allocation3], 256
    $region25: #{tpu_custom_call.1} parent=1 // pred_fallthru
      _
    // Predicated region
    $region26: #{tpu_custom_call.1} parent=1 // pred_check
      _
    $region27: #{tpu_custom_call.1} parent=1 // pred_check_branch
      %69 = sbr.rel (0) target = $region29
    $region28: #{tpu_custom_call.1} parent=1 // pred_region
      %71 = dma.done [#allocation6], 16
    $region29: #{tpu_custom_call.1} parent=1 // pred_fallthru
      _
    // Predicated region
    $region30: #{tpu_custom_call.1} parent=1 // pred_check
      _
    $region31: #{tpu_custom_call.1} parent=1 // pred_check_branch
      %73 = sbr.rel (0) target = $region33
    $region32: #{tpu_custom_call.1} parent=1 // pred_region
      %75 = dma.done [#allocation6], 16
    $region33: #{tpu_custom_call.1} parent=1 // pred_fallthru
      _
    // Predicated region
    $region34: #{tpu_custom_call.1} parent=1 // pred_check
      _
    $region35: #{tpu_custom_call.1} parent=1 // pred_check_branch
      %77 = sbr.rel (0) target = $region37
    $region36: #{tpu_custom_call.1} parent=1 // pred_region
      %79 = dma.done [#allocation9], 3072
    $region37: #{tpu_custom_call.1} parent=1 // pred_fallthru
      _
    %v80 = vld [vmem:[#allocation2] sm:$0xff]
    %v81 = vld [vmem:[#allocation2 + $0x8] sm:$0xff]
    %v82 = vld [vmem:[#allocation5] sm:$0x1]
    %v83 = vld [vmem:[#allocation7] sm:$0x1]
    %84 = vadd.xlane.f32.xlu0 %v80
    %v85 = vpop.xlane.xlu0 %84
    %86 = vadd.xlane.f32.xlu0 %v81
    %v87 = vpop.xlane.xlu0 %86
    %v88 = vmul.f32 %v80, %v80
    %v89 = vmul.f32 %v81, %v81
    %90 = vadd.xlane.f32.xlu0 %v88
    %v91 = vpop.xlane.xlu0 %90
    %92 = vadd.xlane.f32.xlu0 %v89
    %v93 = vpop.xlane.xlu0 %92
    %v94 = vmul.f32 %v85, 0.0078125
    %v95 = vmul.f32 %v87, 0.0078125
    %v96 = vmul.f32 %v91, 0.0078125
    %v97 = vmul.f32 %v93, 0.0078125
    %v98 = vmul.f32 %v94, %v94
    %v99 = vmul.f32 %v95, %v95
    %v100 = vsub.f32 %v96, %v98
    %v101 = vsub.f32 %v97, %v99
    %v102 = vmax.f32 %v100, 0.0
    %v103 = vmax.f32 %v101, 0.0
    %v104 = vsub.f32 %v80, %v94
    %v105 = vsub.f32 %v81, %v95
    %v106 = vadd.f32 %v102, 1e-05
    %v107 = vadd.f32 %v103, 1e-05
    %v108 = vrsqrt.pop %v106
    %v109 = vmul.f32 %v108, %v106
    %v110 = vmul.f32 %v109, %v108
    %v111 = vmul.f32 0.5, %v110
    %v112 = vsub.f32 1.5, %v111
    %v113 = vmul.f32 %v108, %v112
    %vm114 = vweird.f32 %v106
    %vm115 = vweird.f32 %v108
    %vm116 = vmor %vm114, %vm115
    %v117 = vsel %vm116, %v108, %v113
    %v118 = vrsqrt.pop %v107
    %v119 = vmul.f32 %v118, %v107
    %v120 = vmul.f32 %v119, %v118
    %v121 = vmul.f32 0.5, %v120
    %v122 = vsub.f32 1.5, %v121
    %v123 = vmul.f32 %v118, %v122
    %vm124 = vweird.f32 %v107
    %vm125 = vweird.f32 %v118
    %vm126 = vmor %vm124, %vm125
    %v127 = vsel %vm126, %v118, %v123
    %v128 = vmul.f32 %v104, %v117
    %v129 = vmul.f32 %v105, %v127
    %v131 = vperm.slane %v82, 0
    %v133 = vmul.f32 %v128, %v131
    %v134 = vmul.f32 %v129, %v131
    %v136 = vperm.slane %v83, 0
    %v138 = vadd.f32 %v133, %v136
    %v139 = vadd.f32 %v134, %v136
    %v140 = vpack.c.bf16 %v139, %v138
    %v141 = vld [vmem:[#allocation8] sm:$0xff]
    %v142 = vld [vmem:[#allocation8 + $0x8] sm:$0xf]
    %v143 = vld [vmem:[#allocation8 + $0xc] sm:$0xff]
    %v144 = vld [vmem:[#allocation8 + $0x14] sm:$0xf]
    %v145 = vld [vmem:[#allocation8 + $0x18] sm:$0xff]
    %v146 = vld [vmem:[#allocation8 + $0x20] sm:$0xf]
    %v147 = vld [vmem:[#allocation8 + $0x24] sm:$0xff]
    %v148 = vld [vmem:[#allocation8 + $0x2c] sm:$0xf]
    %v149 = vld [vmem:[#allocation8 + $0x30] sm:$0xff]
    %v150 = vld [vmem:[#allocation8 + $0x38] sm:$0xf]
    %v151 = vld [vmem:[#allocation8 + $0x3c] sm:$0xff]
    %v152 = vld [vmem:[#allocation8 + $0x44] sm:$0xf]
    %v153 = vld [vmem:[#allocation8 + $0x48] sm:$0xff]
    %v154 = vld [vmem:[#allocation8 + $0x50] sm:$0xf]
    %v155 = vld [vmem:[#allocation8 + $0x54] sm:$0xff]
    %v156 = vld [vmem:[#allocation8 + $0x5c] sm:$0xf]
    %v157 = vld [vmem:[#allocation8 + $0x60] sm:$0xff]
    %v158 = vld [vmem:[#allocation8 + $0x68] sm:$0xf]
    %v159 = vld [vmem:[#allocation8 + $0x6c] sm:$0xff]
    %v160 = vld [vmem:[#allocation8 + $0x74] sm:$0xf]
    %v161 = vld [vmem:[#allocation8 + $0x78] sm:$0xff]
    %v162 = vld [vmem:[#allocation8 + $0x80] sm:$0xf]
    %v163 = vld [vmem:[#allocation8 + $0x84] sm:$0xff]
    %v164 = vld [vmem:[#allocation8 + $0x8c] sm:$0xf]
    %v165 = vld [vmem:[#allocation8 + $0x90] sm:$0xff]
    %v166 = vld [vmem:[#allocation8 + $0x98] sm:$0xf]
    %v167 = vld [vmem:[#allocation8 + $0x9c] sm:$0xff]
    %v168 = vld [vmem:[#allocation8 + $0xa4] sm:$0xf]
    %v169 = vld [vmem:[#allocation8 + $0xa8] sm:$0xff]
    %v170 = vld [vmem:[#allocation8 + $0xb0] sm:$0xf]
    %v171 = vld [vmem:[#allocation8 + $0xb4] sm:$0xff]
    %v172 = vld [vmem:[#allocation8 + $0xbc] sm:$0xf]
    %v173 = vld [vmem:[%s4] sm:$0x7]
    %v175 = vperm.slane %v173, 0
    %v176 = vperm.slane %v173, 1
    %v177 = vperm.slane %v173, 2
    %v213 = vunpack.c.l.b16 %v141
    %v214 = vunpack.c.h.b16 %v141
    %v215 = vunpack.c.l.b16 %v142
    %v216 = vunpack.c.l.b16 %v143
    %v217 = vunpack.c.h.b16 %v143
    %v218 = vunpack.c.l.b16 %v144
    %v219 = vunpack.c.l.b16 %v145
    %v220 = vunpack.c.h.b16 %v145
    %v221 = vunpack.c.l.b16 %v146
    %v222 = vunpack.c.l.b16 %v147
    %v223 = vunpack.c.h.b16 %v147
    %v224 = vunpack.c.l.b16 %v148
    %v225 = vunpack.c.l.b16 %v149
    %v226 = vunpack.c.h.b16 %v149
    %v227 = vunpack.c.l.b16 %v150
    %v228 = vunpack.c.l.b16 %v151
    %v229 = vunpack.c.h.b16 %v151
    %v230 = vunpack.c.l.b16 %v152
    %v231 = vunpack.c.l.b16 %v153
    %v232 = vunpack.c.h.b16 %v153
    %v233 = vunpack.c.l.b16 %v154
    %v234 = vunpack.c.l.b16 %v155
    %v235 = vunpack.c.h.b16 %v155
    %v236 = vunpack.c.l.b16 %v156
    %v237 = vunpack.c.l.b16 %v157
    %v238 = vunpack.c.h.b16 %v157
    %v239 = vunpack.c.l.b16 %v158
    %v240 = vunpack.c.l.b16 %v159
    %v241 = vunpack.c.h.b16 %v159
    %v242 = vunpack.c.l.b16 %v160
    %v243 = vunpack.c.l.b16 %v161
    %v244 = vunpack.c.h.b16 %v161
    %v245 = vunpack.c.l.b16 %v162
    %v246 = vunpack.c.l.b16 %v163
    %v247 = vunpack.c.h.b16 %v163
    %v248 = vunpack.c.l.b16 %v164
    %v249 = vunpack.c.l.b16 %v165
    %v250 = vunpack.c.h.b16 %v165
    %v251 = vunpack.c.l.b16 %v166
    %v252 = vunpack.c.l.b16 %v167
    %v253 = vunpack.c.h.b16 %v167
    %v254 = vunpack.c.l.b16 %v168
    %v255 = vunpack.c.l.b16 %v169
    %v256 = vunpack.c.h.b16 %v169
    %v257 = vunpack.c.l.b16 %v170
    %v258 = vunpack.c.l.b16 %v171
    %v259 = vunpack.c.h.b16 %v171
    %v260 = vunpack.c.l.b16 %v172
    %v261 = vpack.c.b16 %v216, %v213
    %v262 = vpack.c.b16 %v217, %v214
    %v263 = vpack.c.b16 %v218, %v215
    %v264 = vpack.c.b16 %v222, %v219
    %v265 = vpack.c.b16 %v223, %v220
    %v266 = vpack.c.b16 %v224, %v221
    %v267 = vpack.c.b16 %v228, %v225
    %v268 = vpack.c.b16 %v229, %v226
    %v269 = vpack.c.b16 %v230, %v227
    %v270 = vpack.c.b16 %v234, %v231
    %v271 = vpack.c.b16 %v235, %v232
    %v272 = vpack.c.b16 %v236, %v233
    %v273 = vpack.c.b16 %v240, %v237
    %v274 = vpack.c.b16 %v241, %v238
    %v275 = vpack.c.b16 %v242, %v239
    %v276 = vpack.c.b16 %v246, %v243
    %v277 = vpack.c.b16 %v247, %v244
    %v278 = vpack.c.b16 %v248, %v245
    %v279 = vpack.c.b16 %v252, %v249
    %v280 = vpack.c.b16 %v253, %v250
    %v281 = vpack.c.b16 %v254, %v251
    %v282 = vpack.c.b16 %v258, %v255
    %v283 = vpack.c.b16 %v259, %v256
    %v284 = vpack.c.b16 %v260, %v257
    %309 = vmatpush.bf16.msra.mxu0 %v282
    %310 = vmatpush.bf16.msra.mxu0 %v279
    %311 = vmatpush.bf16.msra.mxu0 %v276
    %312 = vmatpush.bf16.msra.mxu0 %v273
    %313 = vmatpush.bf16.msra.mxu0 %v270
    %314 = vmatpush.bf16.msra.mxu0 %v267
    %315 = vmatpush.bf16.msra.mxu0 %v264
    %316 = vmatpush.bf16.msra.mxu0 %v261
    %317 = vmatmul.bf16.gmra.mxu0 %v140
    %v318 = vpop.f32.mrf.mxu0
    %v319 = vadd.f32 %v175, %v318
    %v320 = vpop.f32.mrf.mxu0
    %v321 = vadd.f32 %v175, %v320
    %322 = vdwg.mxu0
    %323 = vmatpush.bf16.msra.mxu0 %v283
    %324 = vmatpush.bf16.msra.mxu0 %v280
    %325 = vmatpush.bf16.msra.mxu0 %v277
    %326 = vmatpush.bf16.msra.mxu0 %v274
    %327 = vmatpush.bf16.msra.mxu0 %v271
    %328 = vmatpush.bf16.msra.mxu0 %v268
    %329 = vmatpush.bf16.msra.mxu0 %v265
    %330 = vmatpush.bf16.msra.mxu0 %v262
    %331 = vmatmul.bf16.gmra.mxu0 %v140
    %v332 = vpop.f32.mrf.mxu0
    %v333 = vadd.f32 %v176, %v332
    %v334 = vpop.f32.mrf.mxu0
    %v335 = vadd.f32 %v176, %v334
    %336 = vdwg.mxu0
    %337 = vmatpush.bf16.msra.mxu0 %v284
    %338 = vmatpush.bf16.msra.mxu0 %v281
    %339 = vmatpush.bf16.msra.mxu0 %v278
    %340 = vmatpush.bf16.msra.mxu0 %v275
    %341 = vmatpush.bf16.msra.mxu0 %v272
    %342 = vmatpush.bf16.msra.mxu0 %v269
    %343 = vmatpush.bf16.msra.mxu0 %v266
    %344 = vmatpush.bf16.msra.mxu0 %v263
    %345 = vmatmul.bf16.gmra.mxu0 %v140
    %v346 = vpop.f32.mrf.mxu0
    %v347 = vadd.f32 %v177, %v346
    %v348 = vpop.f32.mrf.mxu0
    %v349 = vadd.f32 %v177, %v348
    %350 = vdwg.mxu0
    %v351 = vpack.c.bf16 %v333, %v319
    %v352 = vpack.c.bf16 %v347, %v347
    %v353 = vpack.c.bf16 %v335, %v321
    %v354 = vpack.c.bf16 %v349, %v349
    %355 = vst [vmem:[#allocation10] sm:$0xff] %v351
    %356 = vst [vmem:[#allocation10 + $0x8] sm:$0xf] %v352
    %357 = vst [vmem:[#allocation10 + $0xc] sm:$0xff] %v353
    %358 = vst [vmem:[#allocation10 + $0x14] sm:$0xf] %v354
    // Predicated region
    $region38: #{tpu_custom_call.1} parent=1 // pred_check
      _
    $region39: #{tpu_custom_call.1} parent=1 // pred_check_branch
      %360 = sbr.rel (0) target = $region41
    $region40: #{tpu_custom_call.1} parent=1 // pred_region
      %362 = vsyncadd [#allocation4], 0
      %s363 = sshll.u32 [#allocation10], 4
      %s364 = int_to_ptr.vmem [resolvable:$true] %s363
      %s365 = sshll.u32 %s5, 4
      %s366 = int_to_ptr.hbm [resolvable:$true] %s365
      %371 = dma.vmem_to_hbm [thread:$0]  %s364, 384, %s366, [#allocation4], 192, 192, 12
    $region41: #{tpu_custom_call.1} parent=1 // pred_fallthru
      _
    // Predicated region
    $region42: #{tpu_custom_call.1} parent=1 // pred_check
      _
    $region43: #{tpu_custom_call.1} parent=1 // pred_check_branch
      %373 = sbr.rel (0) target = $region45
    $region44: #{tpu_custom_call.1} parent=1 // pred_region
      %375 = dma.done [#allocation4], 384
    $region45: #{tpu_custom_call.1} parent=1 // pred_fallthru
      _
    %376 = vsyncpa [#allocation3], 1
    %377 = vsyncpa [#allocation6], 1
    %378 = vsyncpa [#allocation9], 1
    %379 = vsyncpa [#allocation4], 1

</llo_original>
